<compile_context>
chip_gen: v5e
topology: v5e:2x2
jax: 0.10.0
libtpu: 0.0.40
codegen_flags: <defaults>
</compile_context>

<pallas_src>
import jax
import jax.numpy as jnp
from jax import lax
from jax.experimental import pallas as pl
from jax.experimental.pallas import tpu as pltpu


def debug_model_kernel(patches_ref, wc_ref, bc_ref, avg_ref, w1_ref, b1_ref,
                       w2_ref, out_ref):
    """Fused conv(im2col matmul) + ReLU + GAP(matmul) + MLP, lane-dense layout.

    patches_ref: [K=Cin*KH*KW, B*H*W]   im2col patches, transposed
    wc_ref:      [Cout, K]              conv weight, flattened
    bc_ref:      [Cout, 1]              conv bias (column vector)
    avg_ref:     [B*H*W, B]             global-average-pool matrix (1/HW blocks)
    w1_ref:      [H1, Cout]             fc1 weight (PyTorch layout, used as-is)
    b1_ref:      [H1, 1]                fc1 bias (column vector)
    w2_ref:      [Nout, H1]             fc2 weight (PyTorch layout, used as-is)
    out_ref:     [Nout, B]              transposed output (b2 added in wrapper)
    """
    # Conv as ONE matmul: [Cout, B*H*W], lane axis = B*H*W (dense).
    conv = jnp.dot(wc_ref[...], patches_ref[...],
                   preferred_element_type=jnp.float32)
    conv = jnp.maximum(conv + bc_ref[...], 0.0)

    # Global average pool as an MXU matmul: [Cout, B].
    feat = jnp.dot(conv, avg_ref[...], preferred_element_type=jnp.float32)

    # FC head: [32 -> 16] ReLU, [16 -> 1] linear (transposed orientation).
    h = jnp.dot(w1_ref[...], feat, preferred_element_type=jnp.float32) + b1_ref[...]
    h = jnp.maximum(h, 0.0)                     # F.relu (use_leaky_relu=False)
    out = jnp.dot(w2_ref[...], h, preferred_element_type=jnp.float32)
    out_ref[...] = out.astype(out_ref.dtype)


def _forward_impl(x_nchw, conv_w, conv_b, fc1_w, fc1_b, fc2_w, fc2_b):
    """x_nchw: [B, Cin, H, W] f32 (PyTorch layout).
    conv_w: [Cout, Cin, KH, KW], conv_b: [Cout]   (PyTorch Conv2d layout)
    fc*_w: [out, in], fc*_b: [out]                (PyTorch Linear layout)
    Returns [B, 1] float32.
    """
    B, Cin, H, W = x_nchw.shape
    Cout, _, KH, KW = conv_w.shape
    H1 = fc1_w.shape[0]
    Nout = fc2_w.shape[0]
    HW = H * W
    K = Cin * KH * KW

    # --- im2col in the wrapper, directly from NCHW (x read from HBM once) ----
    xp = jnp.pad(x_nchw, ((0, 0), (0, 0), (1, 1), (1, 1)))          # [B,Cin,H+2,W+2]
    taps = jnp.stack([xp[:, :, kh:kh + H, kw:kw + W]                # 9 x [B,Cin,H,W]
                      for kh in range(KH) for kw in range(KW)], axis=2)
    # K-index ordering (ci, kh, kw) matches conv_w.reshape(Cout, Cin*KH*KW).
    patches_t = jnp.transpose(taps, (1, 2, 0, 3, 4)).reshape(K, B * HW)

    # --- weight / bias plumbing (layout-only glue) ----------------------------
    wc_t = conv_w.reshape(Cout, K)
    bc = conv_b.reshape(Cout, 1)
    b1 = fc1_b.reshape(H1, 1)

    # GAP block-averaging matrix (constant per shape; XLA constant-folds it).
    avg_t = (jnp.arange(B * HW, dtype=jnp.int32)[:, None] // HW
             == jnp.arange(B, dtype=jnp.int32)[None, :]
             ).astype(jnp.float32) * (1.0 / HW)                      # [B*HW, B]

    vmem = pl.BlockSpec(memory_space=pltpu.MemorySpace.VMEM)
    out_t = pl.pallas_call(
        debug_model_kernel,
        out_shape=jax.ShapeDtypeStruct((Nout, B), jnp.float32),
        in_specs=[vmem] * 7,
        out_specs=vmem,
    )(patches_t, wc_t, bc, avg_t, fc1_w, b1, fc2_w)

    # Tiny [Nout,B] -> [B,Nout] transpose and scalar bias fold into the wrapper.
    return out_t.T + fc2_b[None, :]


debug_model_forward = jax.jit(_forward_impl)


def _reference(x_nchw, conv_w, conv_b, fc1_w, fc1_b, fc2_w, fc2_b):
    """Pure-JAX reference mirroring the PyTorch forward (for validation)."""
    y = lax.conv_general_dilated(
        x_nchw, conv_w, window_strides=(1, 1), padding=((1, 1), (1, 1)),
        dimension_numbers=("NCHW", "OIHW", "NCHW"))
    y = jnp.maximum(y + conv_b[None, :, None, None], 0.0)
    feat = y.mean(axis=(2, 3))                                       # [B, Cout]
    h = jnp.maximum(feat @ fc1_w.T + fc1_b, 0.0)
    return h @ fc2_w.T + fc2_b


if __name__ == "__main__":
    key = jax.random.PRNGKey(0)
    ks = jax.random.split(key, 7)

    B, Cin, H, W = 2, 4, 16, 16
    Cout = 32
    network_specification = [Cout, 16, 1]

    x = jax.random.normal(ks[0], (B, Cin, H, W), jnp.float32)

    # Deterministic parameter init (shapes follow PyTorch Conv2d / Linear).
    conv_w = 0.1 * jax.random.normal(ks[1], (Cout, Cin, 3, 3), jnp.float32)
    conv_b = 0.1 * jax.random.normal(ks[2], (Cout,), jnp.float32)
    fc1_w = 0.1 * jax.random.normal(ks[3], (16, Cout), jnp.float32)
    fc1_b = 0.1 * jax.random.normal(ks[4], (16,), jnp.float32)
    fc2_w = 0.1 * jax.random.normal(ks[5], (1, 16), jnp.float32)
    fc2_b = 0.1 * jax.random.normal(ks[6], (1,), jnp.float32)

    out = debug_model_forward(x, conv_w, conv_b, fc1_w, fc1_b, fc2_w, fc2_b)
    out = jax.block_until_ready(out)

    ref = _reference(x, conv_w, conv_b, fc1_w, fc1_b, fc2_w, fc2_b)
    assert out.shape == (B, 1)
    assert jnp.allclose(out, ref, atol=1e-4, rtol=1e-4), (out, ref)

    print("KERNEL_OK")
</pallas_src>

<mosaic_0001>
module attributes {stable_mosaic.version = 11 : i64} {
  func.func @debug_model_kernel(%arg0: memref<36x512xf32, #tpu.memory_space<vmem>>, %arg1: memref<32x36xf32, #tpu.memory_space<vmem>>, %arg2: memref<32x1xf32, #tpu.memory_space<vmem>>, %arg3: memref<512x2xf32, #tpu.memory_space<vmem>>, %arg4: memref<16x32xf32, #tpu.memory_space<vmem>>, %arg5: memref<16x1xf32, #tpu.memory_space<vmem>>, %arg6: memref<1x16xf32, #tpu.memory_space<vmem>>, %arg7: memref<1x2xf32, #tpu.memory_space<vmem>>) attributes {dimension_semantics = [], scalar_prefetch = 0 : i64, scratch_operands = 0 : i64, tpu.core_type = #tpu.core_type<tc>} {
    %c0 = arith.constant 0 : index
    %c0_0 = arith.constant 0 : index
    %0 = vector.load %arg1[%c0, %c0_0] : memref<32x36xf32, #tpu.memory_space<vmem>>, vector<32x36xf32>
    %c0_1 = arith.constant 0 : index
    %c0_2 = arith.constant 0 : index
    %1 = vector.load %arg0[%c0_1, %c0_2] : memref<36x512xf32, #tpu.memory_space<vmem>>, vector<36x512xf32>
    %cst = arith.constant dense<0.000000e+00> : vector<32x512xf32>
    %2 = tpu.matmul %0, %1, %cst {dimension_numbers = #tpu.dot_dimension_numbers<[1], [0], [0], [1], [0, 0, 1, 1], [], []>} : vector<32x36xf32>, vector<36x512xf32>, vector<32x512xf32> -> vector<32x512xf32>
    %c0_3 = arith.constant 0 : index
    %c0_4 = arith.constant 0 : index
    %3 = vector.load %arg2[%c0_3, %c0_4] : memref<32x1xf32, #tpu.memory_space<vmem>>, vector<32x1xf32>
    %4 = vector.broadcast %3 : vector<32x1xf32> to vector<32x512xf32>
    %5 = arith.addf %2, %4 : vector<32x512xf32>
    %cst_5 = arith.constant 0.000000e+00 : f32
    %6 = vector.broadcast %cst_5 : f32 to vector<32x512xf32>
    %7 = arith.maximumf %5, %6 : vector<32x512xf32>
    %c0_6 = arith.constant 0 : index
    %c0_7 = arith.constant 0 : index
    %8 = vector.load %arg3[%c0_6, %c0_7] : memref<512x2xf32, #tpu.memory_space<vmem>>, vector<512x2xf32>
    %cst_8 = arith.constant dense<0.000000e+00> : vector<32x2xf32>
    %9 = tpu.matmul %7, %8, %cst_8 {dimension_numbers = #tpu.dot_dimension_numbers<[1], [0], [0], [1], [0, 0, 1, 1], [], []>} : vector<32x512xf32>, vector<512x2xf32>, vector<32x2xf32> -> vector<32x2xf32>
    %c0_9 = arith.constant 0 : index
    %c0_10 = arith.constant 0 : index
    %10 = vector.load %arg4[%c0_9, %c0_10] : memref<16x32xf32, #tpu.memory_space<vmem>>, vector<16x32xf32>
    %cst_11 = arith.constant dense<0.000000e+00> : vector<16x2xf32>
    %11 = tpu.matmul %10, %9, %cst_11 {dimension_numbers = #tpu.dot_dimension_numbers<[1], [0], [0], [1], [0, 0, 1, 1], [], []>} : vector<16x32xf32>, vector<32x2xf32>, vector<16x2xf32> -> vector<16x2xf32>
    %c0_12 = arith.constant 0 : index
    %c0_13 = arith.constant 0 : index
    %12 = vector.load %arg5[%c0_12, %c0_13] : memref<16x1xf32, #tpu.memory_space<vmem>>, vector<16x1xf32>
    %13 = vector.broadcast %12 : vector<16x1xf32> to vector<16x2xf32>
    %14 = arith.addf %11, %13 : vector<16x2xf32>
    %cst_14 = arith.constant 0.000000e+00 : f32
    %15 = vector.broadcast %cst_14 : f32 to vector<16x2xf32>
    %16 = arith.maximumf %14, %15 : vector<16x2xf32>
    %c0_15 = arith.constant 0 : index
    %c0_16 = arith.constant 0 : index
    %17 = vector.load %arg6[%c0_15, %c0_16] : memref<1x16xf32, #tpu.memory_space<vmem>>, vector<1x16xf32>
    %cst_17 = arith.constant dense<0.000000e+00> : vector<1x2xf32>
    %18 = tpu.matmul %17, %16, %cst_17 {dimension_numbers = #tpu.dot_dimension_numbers<[1], [0], [0], [1], [0, 0, 1, 1], [], []>} : vector<1x16xf32>, vector<16x2xf32>, vector<1x2xf32> -> vector<1x2xf32>
    %c0_18 = arith.constant 0 : index
    %c0_19 = arith.constant 0 : index
    %19 = vector.load %arg7[%c0_18, %c0_19] : memref<1x2xf32, #tpu.memory_space<vmem>>, vector<1x2xf32>
    tpu.vector_store %arg7[%c0_18, %c0_19], %18 {strides = array<i32>} : memref<1x2xf32, #tpu.memory_space<vmem>>, vector<1x2xf32>,
    return
  }
}

</mosaic_0001>

<llo_original>
// kernel: _forward_impl.1
$region0: #{_forward_impl.1}
  #allocation0 [shape = 'u32[]', space=smem, size = 0x4, offset = 0x4, fixed_abs, tag = 'smem constant byte address 0x4 - core index']
  #allocation1 [shape = 'u32[72,128]{1,0:T(1,128)}', space=vmem, size = 0x9000, scoped, tag = 'internal scratch']
  %s0 = inlined_call_operand.vmem [shape: f32[36,512], index: 0, kind: input, shape index: {}]
  %s1 = inlined_call_operand.vmem [shape: f32[32,36], index: 1, kind: input, shape index: {}]
  %s2 = inlined_call_operand.vmem [shape: f32[32,1], index: 2, kind: input, shape index: {}]
  %s3 = inlined_call_operand.vmem [shape: f32[512,2], index: 3, kind: input, shape index: {}]
  %s4 = inlined_call_operand.vmem [shape: f32[16,32], index: 4, kind: input, shape index: {}]
  %s5 = inlined_call_operand.vmem [shape: f32[16,1], index: 5, kind: input, shape index: {}]
  %s6 = inlined_call_operand.vmem [shape: f32[1,16], index: 6, kind: input, shape index: {}]
  %s7 = inlined_call_operand.vmem [shape: f32[1,2], index: 7, kind: output, shape index: {}]
  %s8 = sld [smem:[#allocation0]]
  $region38: #{_forward_impl.1} parent=0
    _
  %s10 = ssub.s32 1, %s8
  %s11 = scalar_select 0, %s10, %s8
  // Predicated region
  $region2: #{_forward_impl.1} parent=0 // pred_check
    _
  $region3: #{_forward_impl.1} parent=0 // pred_check_branch
    %13 = sbr.rel (0) target = $region5
  $region4: #{_forward_impl.1} parent=0 // pred_region
    _
  $region5: #{_forward_impl.1} parent=0 // pred_fallthru
    _
  // Predicated region
  $region6: #{_forward_impl.1} parent=0 // pred_check
    _
  $region7: #{_forward_impl.1} parent=0 // pred_check_branch
    %15 = sbr.rel (0) target = $region9
  $region8: #{_forward_impl.1} parent=0 // pred_region
    _
  $region9: #{_forward_impl.1} parent=0 // pred_fallthru
    _
  // Predicated region
  $region10: #{_forward_impl.1} parent=0 // pred_check
    _
  $region11: #{_forward_impl.1} parent=0 // pred_check_branch
    %17 = sbr.rel (0) target = $region13
  $region12: #{_forward_impl.1} parent=0 // pred_region
    _
  $region13: #{_forward_impl.1} parent=0 // pred_fallthru
    _
  // Predicated region
  $region14: #{_forward_impl.1} parent=0 // pred_check
    _
  $region15: #{_forward_impl.1} parent=0 // pred_check_branch
    %19 = sbr.rel (0) target = $region17
  $region16: #{_forward_impl.1} parent=0 // pred_region
    _
  $region17: #{_forward_impl.1} parent=0 // pred_fallthru
    _
  // Predicated region
  $region18: #{_forward_impl.1} parent=0 // pred_check
    _
  $region19: #{_forward_impl.1} parent=0 // pred_check_branch
    %21 = sbr.rel (0) target = $region21
  $region20: #{_forward_impl.1} parent=0 // pred_region
    _
  $region21: #{_forward_impl.1} parent=0 // pred_fallthru
    _
  // Predicated region
  $region22: #{_forward_impl.1} parent=0 // pred_check
    _
  $region23: #{_forward_impl.1} parent=0 // pred_check_branch
    %23 = sbr.rel (0) target = $region25
  $region24: #{_forward_impl.1} parent=0 // pred_region
    _
  $region25: #{_forward_impl.1} parent=0 // pred_fallthru
    _
  // Predicated region
  $region26: #{_forward_impl.1} parent=0 // pred_check
    _
  $region27: #{_forward_impl.1} parent=0 // pred_check_branch
    %25 = sbr.rel (0) target = $region29
  $region28: #{_forward_impl.1} parent=0 // pred_region
    _
  $region29: #{_forward_impl.1} parent=0 // pred_fallthru
    _
  %v26 = vld [vmem:[%s1] sm:$0xff]
  %v27 = vld [vmem:[%s1 + $0x8] sm:$0xff]
  %v28 = vld [vmem:[%s1 + $0x10] sm:$0xff]
  %v29 = vld [vmem:[%s1 + $0x18] sm:$0xff]
  %v30 = vld [vmem:[%s0] sm:$0xff]
  %v31 = vld [vmem:[%s0 + $0x8] sm:$0xff]
  %v32 = vld [vmem:[%s0 + $0x10] sm:$0xff]
  %v33 = vld [vmem:[%s0 + $0x18] sm:$0xff]
  %v34 = vld [vmem:[%s0 + $0x20] sm:$0xff]
  %v35 = vld [vmem:[%s0 + $0x28] sm:$0xff]
  %v36 = vld [vmem:[%s0 + $0x30] sm:$0xff]
  %v37 = vld [vmem:[%s0 + $0x38] sm:$0xff]
  %v38 = vld [vmem:[%s0 + $0x40] sm:$0xff]
  %v39 = vld [vmem:[%s0 + $0x48] sm:$0xff]
  %v40 = vld [vmem:[%s0 + $0x50] sm:$0xff]
  %v41 = vld [vmem:[%s0 + $0x58] sm:$0xff]
  %v42 = vld [vmem:[%s0 + $0x60] sm:$0xff]
  %v43 = vld [vmem:[%s0 + $0x68] sm:$0xff]
  %v44 = vld [vmem:[%s0 + $0x70] sm:$0xff]
  %v45 = vld [vmem:[%s0 + $0x78] sm:$0xff]
  %v46 = vld [vmem:[%s0 + $0x80] sm:$0xf]
  %v47 = vld [vmem:[%s0 + $0x88] sm:$0xf]
  %v48 = vld [vmem:[%s0 + $0x90] sm:$0xf]
  %v49 = vld [vmem:[%s0 + $0x98] sm:$0xf]
  %v50 = vld [vmem:[%s2] sm:$0xff]
  %v51 = vld [vmem:[%s2 + $0x8] sm:$0xff]
  %v52 = vld [vmem:[%s2 + $0x10] sm:$0xff]
  %v53 = vld [vmem:[%s2 + $0x18] sm:$0xff]
  %55 = vset.pattern.permute.xlu0 0
  %56 = vperm.xlu0 %55, %v50
  %v57 = vpop.permute.xlu0 %56
  %60 = vset.pattern.permute.xlu0 0
  %61 = vperm.xlu0 %60, %v51
  %v62 = vpop.permute.xlu0 %61
  %65 = vset.pattern.permute.xlu0 0
  %66 = vperm.xlu0 %65, %v52
  %v67 = vpop.permute.xlu0 %66
  %70 = vset.pattern.permute.xlu0 0
  %71 = vperm.xlu0 %70, %v53
  %v72 = vpop.permute.xlu0 %71
  %vm74 = vcmask 293888
  %v76 = vsel %vm74, %v26, 0
  %v79 = vsel %vm74, %v27, 0
  %v82 = vsel %vm74, %v28, 0
  %v85 = vsel %vm74, %v29, 0
  %vm87 = vcmask 1043456
  %v89 = vsel %vm87, %v46, 0
  %v92 = vsel %vm87, %v47, 0
  %v95 = vsel %vm87, %v48, 0
  %v98 = vsel %vm87, %v49, 0
  %100 = vmatpush.msra.mxu0 0.0
  %101 = vmatpush.msra.mxu0 0.0
  %102 = vmatpush.msra.mxu0 0.0
  %103 = vmatpush.msra.mxu0 0.0
  %104 = vmatpush.msra.mxu0 0.0
  %105 = vmatpush.msra.mxu0 0.0
  %106 = vmatpush.msra.mxu0 0.0
  %107 = vmatpush.msra.mxu0 0.0
  %108 = vmatpush.msra.mxu0 0.0
  %109 = vmatpush.msra.mxu0 0.0
  %110 = vmatpush.msra.mxu0 0.0
  %111 = vmatpush.msra.mxu0 %v89
  %112 = vmatpush.msra.mxu0 %v42
  %113 = vmatpush.msra.mxu0 %v38
  %114 = vmatpush.msra.mxu0 %v34
  %115 = vmatpush.msra.mxu0 %v30
  %116 = vmatmul.f32.gmra.mxu0 %v76
  %v117 = vpop.f32.mrf.mxu0
  %v118 = vadd.f32 %v57, %v117
  %119 = vmatmul.f32.gmra.mxu0 %v79
  %v120 = vpop.f32.mrf.mxu0
  %v121 = vadd.f32 %v62, %v120
  %122 = vmatmul.f32.gmra.mxu0 %v82
  %v123 = vpop.f32.mrf.mxu0
  %v124 = vadd.f32 %v67, %v123
  %125 = vmatmul.f32.gmra.mxu0 %v85
  %v126 = vpop.f32.mrf.mxu0
  %v127 = vadd.f32 %v72, %v126
  %128 = vdwg.mxu0
  %129 = vmatpush.msra.mxu0 0.0
  %130 = vmatpush.msra.mxu0 0.0
  %131 = vmatpush.msra.mxu0 0.0
  %132 = vmatpush.msra.mxu0 0.0
  %133 = vmatpush.msra.mxu0 0.0
  %134 = vmatpush.msra.mxu0 0.0
  %135 = vmatpush.msra.mxu0 0.0
  %136 = vmatpush.msra.mxu0 0.0
  %137 = vmatpush.msra.mxu0 0.0
  %138 = vmatpush.msra.mxu0 0.0
  %139 = vmatpush.msra.mxu0 0.0
  %140 = vmatpush.msra.mxu0 %v92
  %141 = vmatpush.msra.mxu0 %v43
  %142 = vmatpush.msra.mxu0 %v39
  %143 = vmatpush.msra.mxu0 %v35
  %144 = vmatpush.msra.mxu0 %v31
  %145 = vmatmul.f32.gmra.mxu0 %v76
  %v146 = vpop.f32.mrf.mxu0
  %v147 = vadd.f32 %v57, %v146
  %148 = vmatmul.f32.gmra.mxu0 %v79
  %v149 = vpop.f32.mrf.mxu0
  %v150 = vadd.f32 %v62, %v149
  %151 = vmatmul.f32.gmra.mxu0 %v82
  %v152 = vpop.f32.mrf.mxu0
  %v153 = vadd.f32 %v67, %v152
  %154 = vmatmul.f32.gmra.mxu0 %v85
  %v155 = vpop.f32.mrf.mxu0
  %v156 = vadd.f32 %v72, %v155
  %157 = vdwg.mxu0
  %158 = vmatpush.msra.mxu0 0.0
  %159 = vmatpush.msra.mxu0 0.0
  %160 = vmatpush.msra.mxu0 0.0
  %161 = vmatpush.msra.mxu0 0.0
  %162 = vmatpush.msra.mxu0 0.0
  %163 = vmatpush.msra.mxu0 0.0
  %164 = vmatpush.msra.mxu0 0.0
  %165 = vmatpush.msra.mxu0 0.0
  %166 = vmatpush.msra.mxu0 0.0
  %167 = vmatpush.msra.mxu0 0.0
  %168 = vmatpush.msra.mxu0 0.0
  %169 = vmatpush.msra.mxu0 %v95
  %170 = vmatpush.msra.mxu0 %v44
  %171 = vmatpush.msra.mxu0 %v40
  %172 = vmatpush.msra.mxu0 %v36
  %173 = vmatpush.msra.mxu0 %v32
  %174 = vmatmul.f32.gmra.mxu0 %v76
  %v175 = vpop.f32.mrf.mxu0
  %v176 = vadd.f32 %v57, %v175
  %177 = vmatmul.f32.gmra.mxu0 %v79
  %v178 = vpop.f32.mrf.mxu0
  %v179 = vadd.f32 %v62, %v178
  %180 = vmatmul.f32.gmra.mxu0 %v82
  %v181 = vpop.f32.mrf.mxu0
  %v182 = vadd.f32 %v67, %v181
  %183 = vmatmul.f32.gmra.mxu0 %v85
  %v184 = vpop.f32.mrf.mxu0
  %v185 = vadd.f32 %v72, %v184
  %186 = vdwg.mxu0
  %187 = vmatpush.msra.mxu0 0.0
  %188 = vmatpush.msra.mxu0 0.0
  %189 = vmatpush.msra.mxu0 0.0
  %190 = vmatpush.msra.mxu0 0.0
  %191 = vmatpush.msra.mxu0 0.0
  %192 = vmatpush.msra.mxu0 0.0
  %193 = vmatpush.msra.mxu0 0.0
  %194 = vmatpush.msra.mxu0 0.0
  %195 = vmatpush.msra.mxu0 0.0
  %196 = vmatpush.msra.mxu0 0.0
  %197 = vmatpush.msra.mxu0 0.0
  %198 = vmatpush.msra.mxu0 %v98
  %199 = vmatpush.msra.mxu0 %v45
  %200 = vmatpush.msra.mxu0 %v41
  %201 = vmatpush.msra.mxu0 %v37
  %202 = vmatpush.msra.mxu0 %v33
  %203 = vmatmul.f32.gmra.mxu0 %v76
  %v204 = vpop.f32.mrf.mxu0
  %v205 = vadd.f32 %v57, %v204
  %206 = vmatmul.f32.gmra.mxu0 %v79
  %v207 = vpop.f32.mrf.mxu0
  %v208 = vadd.f32 %v62, %v207
  %209 = vmatmul.f32.gmra.mxu0 %v82
  %v210 = vpop.f32.mrf.mxu0
  %v211 = vadd.f32 %v67, %v210
  %212 = vmatmul.f32.gmra.mxu0 %v85
  %v213 = vpop.f32.mrf.mxu0
  %v214 = vadd.f32 %v72, %v213
  %215 = vdwg.mxu0
  %v216 = vmax.f32 %v118, 0.0
  %v217 = vmax.f32 %v147, 0.0
  %v218 = vmax.f32 %v176, 0.0
  %v219 = vmax.f32 %v205, 0.0
  %v220 = vmax.f32 %v121, 0.0
  %v221 = vmax.f32 %v150, 0.0
  %v222 = vmax.f32 %v179, 0.0
  %v223 = vmax.f32 %v208, 0.0
  %v224 = vmax.f32 %v124, 0.0
  %v225 = vmax.f32 %v153, 0.0
  %v226 = vmax.f32 %v182, 0.0
  %v227 = vmax.f32 %v211, 0.0
  %v228 = vmax.f32 %v127, 0.0
  %v229 = vmax.f32 %v156, 0.0
  %v230 = vmax.f32 %v185, 0.0
  %v231 = vmax.f32 %v214, 0.0
  %v232 = vld [vmem:[%s3] sm:$0xff]
  %v233 = vld [vmem:[%s3 + $0x8] sm:$0xff]
  %v234 = vld [vmem:[%s3 + $0x10] sm:$0xff]
  %v235 = vld [vmem:[%s3 + $0x18] sm:$0xff]
  %v236 = vld [vmem:[%s3 + $0x20] sm:$0xff]
  %v237 = vld [vmem:[%s3 + $0x28] sm:$0xff]
  %v238 = vld [vmem:[%s3 + $0x30] sm:$0xff]
  %v239 = vld [vmem:[%s3 + $0x38] sm:$0xff]
  %v240 = vld [vmem:[%s3 + $0x40] sm:$0xff]
  %v241 = vld [vmem:[%s3 + $0x48] sm:$0xff]
  %v242 = vld [vmem:[%s3 + $0x50] sm:$0xff]
  %v243 = vld [vmem:[%s3 + $0x58] sm:$0xff]
  %v244 = vld [vmem:[%s3 + $0x60] sm:$0xff]
  %v245 = vld [vmem:[%s3 + $0x68] sm:$0xff]
  %v246 = vld [vmem:[%s3 + $0x70] sm:$0xff]
  %v247 = vld [vmem:[%s3 + $0x78] sm:$0xff]
  %v248 = vld [vmem:[%s3 + $0x80] sm:$0xff]
  %v249 = vld [vmem:[%s3 + $0x88] sm:$0xff]
  %v250 = vld [vmem:[%s3 + $0x90] sm:$0xff]
  %v251 = vld [vmem:[%s3 + $0x98] sm:$0xff]
  %v252 = vld [vmem:[%s3 + $0xa0] sm:$0xff]
  %v253 = vld [vmem:[%s3 + $0xa8] sm:$0xff]
  %v254 = vld [vmem:[%s3 + $0xb0] sm:$0xff]
  %v255 = vld [vmem:[%s3 + $0xb8] sm:$0xff]
  %v256 = vld [vmem:[%s3 + $0xc0] sm:$0xff]
  %v257 = vld [vmem:[%s3 + $0xc8] sm:$0xff]
  %v258 = vld [vmem:[%s3 + $0xd0] sm:$0xff]
  %v259 = vld [vmem:[%s3 + $0xd8] sm:$0xff]
  %v260 = vld [vmem:[%s3 + $0xe0] sm:$0xff]
  %v261 = vld [vmem:[%s3 + $0xe8] sm:$0xff]
  %v262 = vld [vmem:[%s3 + $0xf0] sm:$0xff]
  %v263 = vld [vmem:[%s3 + $0xf8] sm:$0xff]
  %v264 = vld [vmem:[%s3 + $0x100] sm:$0xff]
  %v265 = vld [vmem:[%s3 + $0x108] sm:$0xff]
  %v266 = vld [vmem:[%s3 + $0x110] sm:$0xff]
  %v267 = vld [vmem:[%s3 + $0x118] sm:$0xff]
  %v268 = vld [vmem:[%s3 + $0x120] sm:$0xff]
  %v269 = vld [vmem:[%s3 + $0x128] sm:$0xff]
  %v270 = vld [vmem:[%s3 + $0x130] sm:$0xff]
  %v271 = vld [vmem:[%s3 + $0x138] sm:$0xff]
  %v272 = vld [vmem:[%s3 + $0x140] sm:$0xff]
  %v273 = vld [vmem:[%s3 + $0x148] sm:$0xff]
  %v274 = vld [vmem:[%s3 + $0x150] sm:$0xff]
  %v275 = vld [vmem:[%s3 + $0x158] sm:$0xff]
  %v276 = vld [vmem:[%s3 + $0x160] sm:$0xff]
  %v277 = vld [vmem:[%s3 + $0x168] sm:$0xff]
  %v278 = vld [vmem:[%s3 + $0x170] sm:$0xff]
  %v279 = vld [vmem:[%s3 + $0x178] sm:$0xff]
  %v280 = vld [vmem:[%s3 + $0x180] sm:$0xff]
  %v281 = vld [vmem:[%s3 + $0x188] sm:$0xff]
  %v282 = vld [vmem:[%s3 + $0x190] sm:$0xff]
  %v283 = vld [vmem:[%s3 + $0x198] sm:$0xff]
  %v284 = vld [vmem:[%s3 + $0x1a0] sm:$0xff]
  %v285 = vld [vmem:[%s3 + $0x1a8] sm:$0xff]
  %v286 = vld [vmem:[%s3 + $0x1b0] sm:$0xff]
  %v287 = vld [vmem:[%s3 + $0x1b8] sm:$0xff]
  %v288 = vld [vmem:[%s3 + $0x1c0] sm:$0xff]
  %v289 = vld [vmem:[%s3 + $0x1c8] sm:$0xff]
  %v290 = vld [vmem:[%s3 + $0x1d0] sm:$0xff]
  %v291 = vld [vmem:[%s3 + $0x1d8] sm:$0xff]
  %v292 = vld [vmem:[%s3 + $0x1e0] sm:$0xff]
  %v293 = vld [vmem:[%s3 + $0x1e8] sm:$0xff]
  %v294 = vld [vmem:[%s3 + $0x1f0] sm:$0xff]
  %v295 = vld [vmem:[%s3 + $0x1f8] sm:$0xff]
  %296 = vmatpush.msra.mxu0 %v247
  %297 = vmatpush.msra.mxu0 %v246
  %298 = vmatpush.msra.mxu0 %v245
  %299 = vmatpush.msra.mxu0 %v244
  %300 = vmatpush.msra.mxu0 %v243
  %301 = vmatpush.msra.mxu0 %v242
  %302 = vmatpush.msra.mxu0 %v241
  %303 = vmatpush.msra.mxu0 %v240
  %304 = vmatpush.msra.mxu0 %v239
  %305 = vmatpush.msra.mxu0 %v238
  %306 = vmatpush.msra.mxu0 %v237
  %307 = vmatpush.msra.mxu0 %v236
  %308 = vmatpush.msra.mxu0 %v235
  %309 = vmatpush.msra.mxu0 %v234
  %310 = vmatpush.msra.mxu0 %v233
  %311 = vmatpush.msra.mxu0 %v232
  %312 = vmatmul.f32.gmra.mxu0 %v216
  %v313 = vpop.f32.mrf.mxu0
  %v314 = vadd.f32 0.0, %v313
  %315 = vmatmul.f32.gmra.mxu0 %v220
  %v316 = vpop.f32.mrf.mxu0
  %v317 = vadd.f32 0.0, %v316
  %318 = vmatmul.f32.gmra.mxu0 %v224
  %v319 = vpop.f32.mrf.mxu0
  %v320 = vadd.f32 0.0, %v319
  %321 = vmatmul.f32.gmra.mxu0 %v228
  %v322 = vpop.f32.mrf.mxu0
  %v323 = vadd.f32 0.0, %v322
  %324 = vdwg.mxu0
  %325 = vmatpush.msra.mxu0 %v263
  %326 = vmatpush.msra.mxu0 %v262
  %327 = vmatpush.msra.mxu0 %v261
  %328 = vmatpush.msra.mxu0 %v260
  %329 = vmatpush.msra.mxu0 %v259
  %330 = vmatpush.msra.mxu0 %v258
  %331 = vmatpush.msra.mxu0 %v257
  %332 = vmatpush.msra.mxu0 %v256
  %333 = vmatpush.msra.mxu0 %v255
  %334 = vmatpush.msra.mxu0 %v254
  %335 = vmatpush.msra.mxu0 %v253
  %336 = vmatpush.msra.mxu0 %v252
  %337 = vmatpush.msra.mxu0 %v251
  %338 = vmatpush.msra.mxu0 %v250
  %339 = vmatpush.msra.mxu0 %v249
  %340 = vmatpush.msra.mxu0 %v248
  %341 = vmatmul.f32.gmra.mxu0 %v217
  %v342 = vpop.f32.mrf.mxu0
  %v343 = vadd.f32 %v314, %v342
  %344 = vmatmul.f32.gmra.mxu0 %v221
  %v345 = vpop.f32.mrf.mxu0
  %v346 = vadd.f32 %v317, %v345
  %347 = vmatmul.f32.gmra.mxu0 %v225
  %v348 = vpop.f32.mrf.mxu0
  %v349 = vadd.f32 %v320, %v348
  %350 = vmatmul.f32.gmra.mxu0 %v229
  %v351 = vpop.f32.mrf.mxu0
  %v352 = vadd.f32 %v323, %v351
  %353 = vdwg.mxu0
  %354 = vmatpush.msra.mxu0 %v279
  %355 = vmatpush.msra.mxu0 %v278
  %356 = vmatpush.msra.mxu0 %v277
  %357 = vmatpush.msra.mxu0 %v276
  %358 = vmatpush.msra.mxu0 %v275
  %359 = vmatpush.msra.mxu0 %v274
  %360 = vmatpush.msra.mxu0 %v273
  %361 = vmatpush.msra.mxu0 %v272
  %362 = vmatpush.msra.mxu0 %v271
  %363 = vmatpush.msra.mxu0 %v270
  %364 = vmatpush.msra.mxu0 %v269
  %365 = vmatpush.msra.mxu0 %v268
  %366 = vmatpush.msra.mxu0 %v267
  %367 = vmatpush.msra.mxu0 %v266
  %368 = vmatpush.msra.mxu0 %v265
  %369 = vmatpush.msra.mxu0 %v264
  %370 = vmatmul.f32.gmra.mxu0 %v218
  %v371 = vpop.f32.mrf.mxu0
  %v372 = vadd.f32 %v343, %v371
  %373 = vmatmul.f32.gmra.mxu0 %v222
  %v374 = vpop.f32.mrf.mxu0
  %v375 = vadd.f32 %v346, %v374
  %376 = vmatmul.f32.gmra.mxu0 %v226
  %v377 = vpop.f32.mrf.mxu0
  %v378 = vadd.f32 %v349, %v377
  %379 = vmatmul.f32.gmra.mxu0 %v230
  %v380 = vpop.f32.mrf.mxu0
  %v381 = vadd.f32 %v352, %v380
  %382 = vdwg.mxu0
  %383 = vmatpush.msra.mxu0 %v295
  %384 = vmatpush.msra.mxu0 %v294
  %385 = vmatpush.msra.mxu0 %v293
  %386 = vmatpush.msra.mxu0 %v292
  %387 = vmatpush.msra.mxu0 %v291
  %388 = vmatpush.msra.mxu0 %v290
  %389 = vmatpush.msra.mxu0 %v289
  %390 = vmatpush.msra.mxu0 %v288
  %391 = vmatpush.msra.mxu0 %v287
  %392 = vmatpush.msra.mxu0 %v286
  %393 = vmatpush.msra.mxu0 %v285
  %394 = vmatpush.msra.mxu0 %v284
  %395 = vmatpush.msra.mxu0 %v283
  %396 = vmatpush.msra.mxu0 %v282
  %397 = vmatpush.msra.mxu0 %v281
  %398 = vmatpush.msra.mxu0 %v280
  %399 = vmatmul.f32.gmra.mxu0 %v219
  %v400 = vpop.f32.mrf.mxu0
  %v401 = vadd.f32 %v372, %v400
  %402 = vmatmul.f32.gmra.mxu0 %v223
  %v403 = vpop.f32.mrf.mxu0
  %v404 = vadd.f32 %v375, %v403
  %405 = vmatmul.f32.gmra.mxu0 %v227
  %v406 = vpop.f32.mrf.mxu0
  %v407 = vadd.f32 %v378, %v406
  %408 = vmatmul.f32.gmra.mxu0 %v231
  %v409 = vpop.f32.mrf.mxu0
  %v410 = vadd.f32 %v381, %v409
  %411 = vdwg.mxu0
  %v412 = vld [vmem:[%s4] sm:$0xff]
  %v413 = vld [vmem:[%s4 + $0x8] sm:$0xff]
  %v414 = vld [vmem:[%s5] sm:$0xff]
  %v415 = vld [vmem:[%s5 + $0x8] sm:$0xff]
  %417 = vset.pattern.permute.xlu0 0
  %418 = vperm.xlu0 %417, %v414
  %v419 = vpop.permute.xlu0 %418
  %422 = vset.pattern.permute.xlu0 0
  %423 = vperm.xlu0 %422, %v415
  %v424 = vpop.permute.xlu0 %423
  %vm426 = vcmask 261120
  %v428 = vsel %vm426, %v412, 0
  %v431 = vsel %vm426, %v413, 0
  %433 = vmatpush.msra.mxu0 0.0
  %434 = vmatpush.msra.mxu0 0.0
  %435 = vmatpush.msra.mxu0 0.0
  %436 = vmatpush.msra.mxu0 0.0
  %437 = vmatpush.msra.mxu0 0.0
  %438 = vmatpush.msra.mxu0 0.0
  %439 = vmatpush.msra.mxu0 0.0
  %440 = vmatpush.msra.mxu0 0.0
  %441 = vmatpush.msra.mxu0 0.0
  %442 = vmatpush.msra.mxu0 0.0
  %443 = vmatpush.msra.mxu0 0.0
  %444 = vmatpush.msra.mxu0 0.0
  %445 = vmatpush.msra.mxu0 %v410
  %446 = vmatpush.msra.mxu0 %v407
  %447 = vmatpush.msra.mxu0 %v404
  %448 = vmatpush.msra.mxu0 %v401
  %449 = vmatmul.f32.gmra.mxu0 %v428
  %v450 = vpop.f32.mrf.mxu0
  %v451 = vadd.f32 %v419, %v450
  %452 = vmatmul.f32.gmra.mxu0 %v431
  %v453 = vpop.f32.mrf.mxu0
  %v454 = vadd.f32 %v424, %v453
  %455 = vdwg.mxu0
  %v456 = vmax.f32 %v451, 0.0
  %v457 = vmax.f32 %v454, 0.0
  %v458 = vld [vmem:[%s6] sm:$0x1]
  %vm459 = vcmask 130048
  %v461 = vsel %vm459, %v458, 0
  %463 = vmatpush.msra.mxu0 0.0
  %464 = vmatpush.msra.mxu0 0.0
  %465 = vmatpush.msra.mxu0 0.0
  %466 = vmatpush.msra.mxu0 0.0
  %467 = vmatpush.msra.mxu0 0.0
  %468 = vmatpush.msra.mxu0 0.0
  %469 = vmatpush.msra.mxu0 0.0
  %470 = vmatpush.msra.mxu0 0.0
  %471 = vmatpush.msra.mxu0 0.0
  %472 = vmatpush.msra.mxu0 0.0
  %473 = vmatpush.msra.mxu0 0.0
  %474 = vmatpush.msra.mxu0 0.0
  %475 = vmatpush.msra.mxu0 0.0
  %476 = vmatpush.msra.mxu0 0.0
  %477 = vmatpush.msra.mxu0 %v457
  %478 = vmatpush.msra.mxu0 %v456
  %479 = vmatmul.f32.gmra.mxu0 %v461
  %v480 = vpop.f32.mrf.mxu0
  %v481 = vadd.f32 0.0, %v480
  %482 = vdwg.mxu0
  %vm483 = vcmask 8192
  %484 = vst.msk [vmem:[%s7] sm:$0x1] %vm483, %v481
  // Predicated region
  $region30: #{_forward_impl.1} parent=0 // pred_check
    _
  $region31: #{_forward_impl.1} parent=0 // pred_check_branch
    %486 = sbr.rel (0) target = $region33
  $region32: #{_forward_impl.1} parent=0 // pred_region
    _
  $region33: #{_forward_impl.1} parent=0 // pred_fallthru
    _
  // Predicated region
  $region34: #{_forward_impl.1} parent=0 // pred_check
    _
  $region35: #{_forward_impl.1} parent=0 // pred_check_branch
    %488 = sbr.rel (0) target = $region37
  $region36: #{_forward_impl.1} parent=0 // pred_region
    _
  $region37: #{_forward_impl.1} parent=0 // pred_fallthru
    _

</llo_original>
